<compile_context>
chip_gen: v7x
topology: tpu7x:2x2x1
jax: 0.10.0
libtpu: 0.0.40
codegen_flags: <defaults>
</compile_context>

<pallas_src>
import jax
import jax.numpy as jnp
from jax.experimental import pallas as pl
from jax.experimental.pallas import tpu as pltpu


# ---------------------------------------------------------------------------
# Kernel
# ---------------------------------------------------------------------------
def _graph_output_kernel(atoms_ref, bonds_ref, mask_ref,
                         wa_ref, wbt_ref, bias_ref, out_ref):
    tb, A = mask_ref.shape
    FP = out_ref.shape[-1]

    # Linear(cat([atoms, sum_d bonds], -1)) == atoms @ Wa + bonds_flat @ tile(Wb, D) + b
    z = (jnp.dot(atoms_ref[...], wa_ref[...], preferred_element_type=jnp.float32)
         + jnp.dot(bonds_ref[...], wbt_ref[...], preferred_element_type=jnp.float32)
         + bias_ref[...].astype(jnp.float32))                    # (tb*A, FP) f32

    # Leading-dim split (lane dim untouched), mask, and per-sample atom sum.
    fp = jnp.tanh(z).reshape(tb, A, FP)
    fp = fp * mask_ref[...][:, :, None].astype(jnp.float32)      # (tb, A, FP)
    out_ref[...] = jnp.sum(fp, axis=1).astype(out_ref.dtype)     # (tb, FP)


# ---------------------------------------------------------------------------
# Sizing helpers (generation-aware)
# ---------------------------------------------------------------------------
def _roundup(x, m):
    return -(-int(x) // m) * m


def _vmem_capacity_bytes():
    try:
        info = pltpu.get_tpu_info()
        cap = getattr(info, "vmem_capacity_bytes", None)
        if cap:
            return int(cap)
    except Exception:
        pass
    return 64 * 1024 * 1024  # conservative fallback (v7x per-TensorCore VMEM)


def _block_bytes(tb, A, Fa, DFb, FP, in_itemsize):
    """Lane-padded VMEM footprint of one set of streamed blocks."""
    return (tb * A * _roundup(Fa, 128) * in_itemsize        # atoms
            + tb * A * _roundup(DFb, 128) * in_itemsize     # bonds (pre-flattened)
            + tb * _roundup(A, 128) * 4                     # mask  (f32)
            + tb * _roundup(FP, 128) * 4)                   # output (f32)


def _choose_tb(B, A, Fa, DFb, FP, in_itemsize):
    cap = _vmem_capacity_bytes()
    budget = int(0.35 * cap)                      # double-buffered streamed working set
    per_sample = 2 * _block_bytes(1, A, Fa, DFb, FP, in_itemsize)
    tb = budget // max(per_sample, 1)
    tb = min(tb, 1024)                            # plenty to amortise ~0.35us/step overhead
    tb = min(tb, _roundup(B, 8))                  # never (much) larger than the batch
    if B > 8:
        tb = min(tb, _roundup(pl.cdiv(B, 2), 8))  # >=2 grid steps keeps both v7x TCs fed
    return max(8, (int(tb) // 8) * 8)             # multiple of 8 for sublane-aligned blocks


# ---------------------------------------------------------------------------
# Wrapper
# ---------------------------------------------------------------------------
def graph_output(atoms, bonds, edges, w_atoms, w_bonds, bias, *, tb=None):
    B, A, Fa = atoms.shape
    _, _, D, Fb = bonds.shape
    FP = w_atoms.shape[1]
    DFb = D * Fb
    in_itemsize = jnp.dtype(atoms.dtype).itemsize

    # Degree mask precomputed outside the kernel: avoids streaming a 4-wide
    # int32 lane dim (padded 4->128 in VMEM) and an in-kernel cross-lane `any`.
    mask = jnp.any(edges != -1, axis=-1).astype(jnp.float32)      # (B, A)

    # Free row-major leading-dim merges; kernel sees clean (rows, lanes) slabs.
    atoms2d = atoms.reshape(B * A, Fa)
    bonds2d = bonds.reshape(B * A, DFb)
    wbt = jnp.tile(w_bonds, (D, 1))               # (D*Fb, FP): folds the sum over degree
    bias2d = bias.reshape(1, FP)

    if tb is None:
        tb = _choose_tb(B, A, Fa, DFb, FP, in_itemsize)
    tb = max(8, (int(tb) // 8) * 8)

    grid = pl.cdiv(B, tb)                         # ragged tail -> partial boundary block

    # Scoped-VMEM limit: double-buffered streamed blocks + (double-buffered) weights,
    # with lane padding accounted for and a generation-aware physical cap.
    w_itemsize = jnp.dtype(w_atoms.dtype).itemsize
    est = (2 * _block_bytes(tb, A, Fa, DFb, FP, in_itemsize)
           + 2 * (_roundup(Fa, 8) + _roundup(DFb, 8) + 8) * _roundup(FP, 128) * w_itemsize)
    vmem_limit = int(min(0.9 * _vmem_capacity_bytes(),
                         max(32 * 1024 * 1024, 1.5 * est)))

    out = pl.pallas_call(
        _graph_output_kernel,
        out_shape=jax.ShapeDtypeStruct((B, FP), jnp.float32),
        grid_spec=pltpu.PrefetchScalarGridSpec(
            num_scalar_prefetch=0,
            grid=(grid,),
            in_specs=[
                pl.BlockSpec((tb * A, Fa),  lambda b: (b, 0)),   # atoms rows
                pl.BlockSpec((tb * A, DFb), lambda b: (b, 0)),   # bonds rows (flattened D*Fb)
                pl.BlockSpec((tb, A),       lambda b: (b, 0)),   # per-atom degree mask
                pl.BlockSpec((Fa, FP),      lambda b: (0, 0)),   # W_atoms
                pl.BlockSpec((DFb, FP),     lambda b: (0, 0)),   # W_bonds tiled D times
                pl.BlockSpec((1, FP),       lambda b: (0, 0)),   # bias
            ],
            out_specs=pl.BlockSpec((tb, FP), lambda b: (b, 0)),
        ),
        compiler_params=pltpu.CompilerParams(
            dimension_semantics=("parallel",),
            vmem_limit_bytes=vmem_limit,
        ),
    )(atoms2d, bonds2d, mask, w_atoms, wbt, bias2d)

    return out


# ---------------------------------------------------------------------------
# Pure-JAX reference mirroring the PyTorch forward
# ---------------------------------------------------------------------------
def graph_output_ref(atoms, bonds, edges, w_atoms, w_bonds, bias):
    deg = jnp.sum((edges != -1).astype(jnp.float32), axis=-1, keepdims=True)
    mask = (deg != 0.0).astype(jnp.float32)
    summed_bonds = jnp.sum(bonds, axis=-2)
    summed = jnp.concatenate([atoms, summed_bonds], axis=-1)
    w = jnp.concatenate([w_atoms, w_bonds], axis=0)               # (Fa+Fb, FP)
    fp = jnp.tanh(summed @ w + bias) * mask
    return jnp.sum(fp, axis=-2)


if __name__ == "__main__":
    # Shapes matching the module defaults: input_dim = Fa + Fb = 128,
    # fp_length = 128 (lane-dense output), max_atoms = 8, max_degree = 4.
    A, D = 8, 4
    Fa, Fb = 64, 64
    FP = 128

    key = jax.random.PRNGKey(0)
    k_at, k_bd, k_ed, k_w, k_b = jax.random.split(key, 5)

    def make_inputs(B, k_at, k_bd, k_ed):
        atoms = jax.random.normal(k_at, (B, A, Fa), dtype=jnp.float32)
        bonds = jax.random.normal(k_bd, (B, A, D, Fb), dtype=jnp.float32)
        # edges: random neighbour indices, some -1, plus one fully
        # disconnected atom per sample so the degree-mask path is exercised.
        edges = jax.random.randint(k_ed, (B, A, D), -1, A).astype(jnp.int32)
        edges = edges.at[:, -1, :].set(-1)
        return atoms, bonds, edges

    # Deterministic "Linear(input_dim=128, fp_len=128)" parameters.
    bound = 1.0 / jnp.sqrt(jnp.float32(Fa + Fb))
    w_full = jax.random.uniform(k_w, (Fa + Fb, FP), jnp.float32, -bound, bound)
    w_atoms = w_full[:Fa]
    w_bonds = w_full[Fa:]
    bias = jax.random.uniform(k_b, (FP,), jnp.float32, -bound, bound)

    # Test 1: tiny batch (single partial block), auto tile size.
    atoms, bonds, edges = make_inputs(4, k_at, k_bd, k_ed)
    out = jax.block_until_ready(
        graph_output(atoms, bonds, edges, w_atoms, w_bonds, bias))
    ref = graph_output_ref(atoms, bonds, edges, w_atoms, w_bonds, bias)
    assert out.shape == (4, FP)
    assert jnp.allclose(out, ref, atol=1e-4, rtol=1e-4), "mismatch vs reference (B=4)"

    # Test 2: multi-step grid with a ragged tail (B=20, tb=8 -> grid=3,
    # last block has 4 valid samples) to exercise boundary-block handling.
    k_at2, k_bd2, k_ed2 = jax.random.split(k_ed, 3)
    atoms2, bonds2, edges2 = make_inputs(20, k_at2, k_bd2, k_ed2)
    out2 = jax.block_until_ready(
        graph_output(atoms2, bonds2, edges2, w_atoms, w_bonds, bias, tb=8))
    ref2 = graph_output_ref(atoms2, bonds2, edges2, w_atoms, w_bonds, bias)
    assert out2.shape == (20, FP)
    assert jnp.allclose(out2, ref2, atol=1e-4, rtol=1e-4), "mismatch vs reference (B=20)"

    print("KERNEL_OK")
</pallas_src>

<mosaic_0001>
module attributes {stable_mosaic.version = 11 : i64} {
  func.func @_graph_output_kernel(%arg0: i32, %arg1: memref<64x64xf32, #tpu.memory_space<vmem>>, %arg2: memref<64x256xf32, #tpu.memory_space<vmem>>, %arg3: memref<8x8xf32, #tpu.memory_space<vmem>>, %arg4: memref<64x128xf32, #tpu.memory_space<vmem>>, %arg5: memref<256x128xf32, #tpu.memory_space<vmem>>, %arg6: memref<1x128xf32, #tpu.memory_space<vmem>>, %arg7: memref<8x128xf32, #tpu.memory_space<vmem>>) attributes {dimension_semantics = [#tpu.dimension_semantics<parallel>], iteration_bounds = array<i64: 1>, scalar_prefetch = 0 : i64, scratch_operands = 0 : i64, tpu.core_type = #tpu.core_type<tc>, window_params = [{transform_indices = @transform_0, window_bounds = array<i64: 64, 64>}, {transform_indices = @transform_1, window_bounds = array<i64: 64, 256>}, {transform_indices = @transform_2, window_bounds = array<i64: 8, 8>}, {pipeline_mode = #tpu.pipeline_mode<synchronous>, transform_indices = @transform_3, window_bounds = array<i64: 64, 128>}, {pipeline_mode = #tpu.pipeline_mode<synchronous>, transform_indices = @transform_4, window_bounds = array<i64: 256, 128>}, {pipeline_mode = #tpu.pipeline_mode<synchronous>, transform_indices = @transform_5, window_bounds = array<i64: 1, 128>}, {transform_indices = @transform_6, window_bounds = array<i64: 8, 128>}]} {
    %c0 = arith.constant 0 : index
    %c0_0 = arith.constant 0 : index
    %0 = vector.load %arg1[%c0, %c0_0] : memref<64x64xf32, #tpu.memory_space<vmem>>, vector<64x64xf32>
    %c0_1 = arith.constant 0 : index
    %c0_2 = arith.constant 0 : index
    %1 = vector.load %arg4[%c0_1, %c0_2] : memref<64x128xf32, #tpu.memory_space<vmem>>, vector<64x128xf32>
    %cst = arith.constant dense<0.000000e+00> : vector<64x128xf32>
    %2 = tpu.matmul %0, %1, %cst {dimension_numbers = #tpu.dot_dimension_numbers<[1], [0], [0], [1], [0, 0, 1, 1], [], []>} : vector<64x64xf32>, vector<64x128xf32>, vector<64x128xf32> -> vector<64x128xf32>
    %c0_3 = arith.constant 0 : index
    %c0_4 = arith.constant 0 : index
    %3 = vector.load %arg2[%c0_3, %c0_4] : memref<64x256xf32, #tpu.memory_space<vmem>>, vector<64x256xf32>
    %c0_5 = arith.constant 0 : index
    %c0_6 = arith.constant 0 : index
    %4 = vector.load %arg5[%c0_5, %c0_6] : memref<256x128xf32, #tpu.memory_space<vmem>>, vector<256x128xf32>
    %cst_7 = arith.constant dense<0.000000e+00> : vector<64x128xf32>
    %5 = tpu.matmul %3, %4, %cst_7 {dimension_numbers = #tpu.dot_dimension_numbers<[1], [0], [0], [1], [0, 0, 1, 1], [], []>} : vector<64x256xf32>, vector<256x128xf32>, vector<64x128xf32> -> vector<64x128xf32>
    %6 = arith.addf %2, %5 : vector<64x128xf32>
    %c0_8 = arith.constant 0 : index
    %c0_9 = arith.constant 0 : index
    %7 = vector.load %arg6[%c0_8, %c0_9] : memref<1x128xf32, #tpu.memory_space<vmem>>, vector<1x128xf32>
    %8 = vector.broadcast %7 : vector<1x128xf32> to vector<64x128xf32>
    %9 = arith.addf %6, %8 : vector<64x128xf32>
    %10 = math.tanh %9 : vector<64x128xf32>
    %11 = vector.shape_cast %10 : vector<64x128xf32> to vector<8x8x128xf32>
    %c0_10 = arith.constant 0 : index
    %c0_11 = arith.constant 0 : index
    %12 = vector.load %arg3[%c0_10, %c0_11] : memref<8x8xf32, #tpu.memory_space<vmem>>, vector<8x8xf32>
    %13 = vector.shape_cast %12 : vector<8x8xf32> to vector<8x8x1xf32>
    %14 = vector.broadcast %13 : vector<8x8x1xf32> to vector<8x8x128xf32>
    %15 = arith.mulf %11, %14 : vector<8x8x128xf32>
    %cst_12 = arith.constant dense<0.000000e+00> : vector<8x128xf32>
    %16 = vector.multi_reduction <add>, %15, %cst_12 [1] : vector<8x8x128xf32> to vector<8x128xf32>
    %c0_13 = arith.constant 0 : index
    %c0_14 = arith.constant 0 : index
    %17 = vector.load %arg7[%c0_13, %c0_14] : memref<8x128xf32, #tpu.memory_space<vmem>>, vector<8x128xf32>
    tpu.vector_store %arg7[%c0_13, %c0_14], %16 {strides = array<i32>} : memref<8x128xf32, #tpu.memory_space<vmem>>, vector<8x128xf32>,
    return
  }
  func.func @transform_0(%arg0: i32) -> (i32, i32) {
    %c0_i32 = arith.constant 0 : i32
    %c0_i32_0 = arith.constant 0 : i32
    return %arg0, %c0_i32 : i32, i32
  }
  func.func @transform_1(%arg0: i32) -> (i32, i32) {
    %c0_i32 = arith.constant 0 : i32
    %c0_i32_0 = arith.constant 0 : i32
    return %arg0, %c0_i32 : i32, i32
  }
  func.func @transform_2(%arg0: i32) -> (i32, i32) {
    %c0_i32 = arith.constant 0 : i32
    %c0_i32_0 = arith.constant 0 : i32
    return %arg0, %c0_i32 : i32, i32
  }
  func.func @transform_3(%arg0: i32) -> (i32, i32) {
    %c0_i32 = arith.constant 0 : i32
    %c0_i32_0 = arith.constant 0 : i32
    %c0_i32_1 = arith.constant 0 : i32
    return %c0_i32, %c0_i32_0 : i32, i32
  }
  func.func @transform_4(%arg0: i32) -> (i32, i32) {
    %c0_i32 = arith.constant 0 : i32
    %c0_i32_0 = arith.constant 0 : i32
    %c0_i32_1 = arith.constant 0 : i32
    return %c0_i32, %c0_i32_0 : i32, i32
  }
  func.func @transform_5(%arg0: i32) -> (i32, i32) {
    %c0_i32 = arith.constant 0 : i32
    %c0_i32_0 = arith.constant 0 : i32
    %c0_i32_1 = arith.constant 0 : i32
    return %c0_i32, %c0_i32_0 : i32, i32
  }
  func.func @transform_6(%arg0: i32) -> (i32, i32) {
    %c0_i32 = arith.constant 0 : i32
    %c0_i32_0 = arith.constant 0 : i32
    return %arg0, %c0_i32 : i32, i32
  }
}

</mosaic_0001>

<llo_original>
// kernel: tpu_custom_call.1
$region0: #{tpu_custom_call.1}
  #allocation0 [shape = 'u32[]', space=smem, size = 0x4, offset = 0x4, fixed_abs, tag = 'smem constant byte address 0x4 - core index']
  #allocation1 [shape = 'u32[144,128]{1,0:T(1,128)}', space=vmem, size = 0x12000, scoped, tag = 'internal scratch']
  %s0 = inlined_call_operand.hbm [shape: f32[32,64], index: 0, kind: input, shape index: {}]
  %s1 = inlined_call_operand.hbm [shape: f32[32,256], index: 1, kind: input, shape index: {}]
  %s2 = inlined_call_operand.vmem [shape: f32[4,8], index: 2, kind: input, shape index: {}]
  %s3 = inlined_call_operand.hbm [shape: f32[64,128], index: 3, kind: input, shape index: {}]
  %s4 = inlined_call_operand.hbm [shape: f32[256,128], index: 4, kind: input, shape index: {}]
  %s5 = inlined_call_operand.vmem [shape: f32[1,128], index: 5, kind: input, shape index: {}]
  %s6 = inlined_call_operand.hbm [shape: f32[4,128], index: 6, kind: output, shape index: {}]
  %s7 = sld [smem:[#allocation0]]
  $region50: #{tpu_custom_call.1} parent=0
    _
  %s9 = ssub.s32 1, %s7
  %s10 = scalar_select 0, %s9, %s7
  $region1: #{tpu_custom_call.1} parent=0
    #allocation2 [shape = 'u8[32768]{0}', space=vmem, size = 0x8000, scoped, tag = 'input window, operand 0, single buffered']
    #allocation3 [shape = 's32[1]{0}', space=sflag, size = 0x4, scoped, tag = 'scoped memory for tpu_custom_call.1']
    #allocation4 [shape = 's32[1]{0}', space=sflag, size = 0x4, scoped, tag = 'scoped memory for tpu_custom_call.1']
    #allocation5 [shape = 'u8[65536]{0}', space=vmem, size = 0x10000, scoped, tag = 'input window, operand 1, single buffered']
    #allocation6 [shape = 's32[1]{0}', space=sflag, size = 0x4, scoped, tag = 'scoped memory for tpu_custom_call.1']
    #allocation7 [shape = 'u8[32768]{0}', space=vmem, size = 0x8000, scoped, tag = 'input window, operand 3, single buffered']
    #allocation8 [shape = 'u8[131072]{0}', space=vmem, size = 0x20000, scoped, tag = 'input window, operand 4, single buffered']
    #allocation9 [shape = 's32[1]{0}', space=sflag, size = 0x4, scoped, tag = 'scoped memory for tpu_custom_call.1']
    #allocation10 [shape = 'u8[4096]{0}', space=vmem, size = 0x1000, scoped, tag = 'output window, operand 0, single buffered']
    %11 = vsyncpa [#allocation3], 0
    %12 = vsyncpa [#allocation6], 0
    %13 = vsyncpa [#allocation9], 0
    %14 = vsyncpa [#allocation4], 0
    // Predicated region
    $region2: #{tpu_custom_call.1} parent=1 // pred_check
      _
    $region3: #{tpu_custom_call.1} parent=1 // pred_check_branch
      %16 = sbr.rel (0) target = $region5
    $region4: #{tpu_custom_call.1} parent=1 // pred_region
      %s18 = ssub.s32 1024, 512
      %19 = vsyncadd [#allocation3], %s18
      %s20 = sshll.u32 [#allocation2], 4
      %s21 = int_to_ptr.vmem [resolvable:$true] %s20
      %26 = dma.hbm_to_vmem [thread:$0]  %s0, 512, %s21, [#allocation3], 128, 128, 8
    $region5: #{tpu_custom_call.1} parent=1 // pred_fallthru
      _
    // Predicated region
    $region6: #{tpu_custom_call.1} parent=1 // pred_check
      _
    $region7: #{tpu_custom_call.1} parent=1 // pred_check_branch
      %28 = sbr.rel (0) target = $region9
    $region8: #{tpu_custom_call.1} parent=1 // pred_region
      %s30 = ssub.s32 2048, 1024
      %31 = vsyncadd [#allocation6], %s30
      %s32 = sshll.u32 [#allocation5], 4
      %s33 = int_to_ptr.vmem [resolvable:$true] %s32
      %38 = dma.hbm_to_vmem [thread:$0]  %s1, 1024, %s33, [#allocation6], 256, 256, 16
    $region9: #{tpu_custom_call.1} parent=1 // pred_fallthru
      _
    // Predicated region
    $region10: #{tpu_custom_call.1} parent=1 // pred_check
      _
    $region11: #{tpu_custom_call.1} parent=1 // pred_check_branch
      %40 = sbr.rel (0) target = $region13
    $region12: #{tpu_custom_call.1} parent=1 // pred_region
      _
    $region13: #{tpu_custom_call.1} parent=1 // pred_fallthru
      _
    // Predicated region
    $region14: #{tpu_custom_call.1} parent=1 // pred_check
      _
    $region15: #{tpu_custom_call.1} parent=1 // pred_check_branch
      %42 = sbr.rel (0) target = $region17
    $region16: #{tpu_custom_call.1} parent=1 // pred_region
      %s44 = ssub.s32 1024, 1024
      %45 = vsyncadd [#allocation6], %s44
      %s46 = sshll.u32 [#allocation7], 4
      %s47 = int_to_ptr.vmem [resolvable:$true] %s46
      %52 = dma.hbm_to_vmem [thread:$0]  %s3, 1024, %s47, [#allocation6], 128, 128, 8
    $region17: #{tpu_custom_call.1} parent=1 // pred_fallthru
      _
    // Predicated region
    $region18: #{tpu_custom_call.1} parent=1 // pred_check
      _
    $region19: #{tpu_custom_call.1} parent=1 // pred_check_branch
      %54 = sbr.rel (0) target = $region21
    $region20: #{tpu_custom_call.1} parent=1 // pred_region
      %s56 = ssub.s32 4096, 4096
      %57 = vsyncadd [#allocation9], %s56
      %s58 = sshll.u32 [#allocation8], 4
      %s59 = int_to_ptr.vmem [resolvable:$true] %s58
      %64 = dma.hbm_to_vmem [thread:$0]  %s4, 4096, %s59, [#allocation9], 128, 128, 8
    $region21: #{tpu_custom_call.1} parent=1 // pred_fallthru
      _
    // Predicated region
    $region22: #{tpu_custom_call.1} parent=1 // pred_check
      _
    $region23: #{tpu_custom_call.1} parent=1 // pred_check_branch
      %66 = sbr.rel (0) target = $region25
    $region24: #{tpu_custom_call.1} parent=1 // pred_region
      _
    $region25: #{tpu_custom_call.1} parent=1 // pred_fallthru
      _
    // Predicated region
    $region26: #{tpu_custom_call.1} parent=1 // pred_check
      _
    $region27: #{tpu_custom_call.1} parent=1 // pred_check_branch
      %68 = sbr.rel (0) target = $region29
    $region28: #{tpu_custom_call.1} parent=1 // pred_region
      %69 = dma.done [#allocation3], 1024
    $region29: #{tpu_custom_call.1} parent=1 // pred_fallthru
      _
    // Predicated region
    $region30: #{tpu_custom_call.1} parent=1 // pred_check
      _
    $region31: #{tpu_custom_call.1} parent=1 // pred_check_branch
      %71 = sbr.rel (0) target = $region33
    $region32: #{tpu_custom_call.1} parent=1 // pred_region
      %72 = dma.done [#allocation6], 2048
    $region33: #{tpu_custom_call.1} parent=1 // pred_fallthru
      _
    // Predicated region
    $region34: #{tpu_custom_call.1} parent=1 // pred_check
      _
    $region35: #{tpu_custom_call.1} parent=1 // pred_check_branch
      %74 = sbr.rel (0) target = $region37
    $region36: #{tpu_custom_call.1} parent=1 // pred_region
      %75 = dma.done [#allocation6], 1024
    $region37: #{tpu_custom_call.1} parent=1 // pred_fallthru
      _
    // Predicated region
    $region38: #{tpu_custom_call.1} parent=1 // pred_check
      _
    $region39: #{tpu_custom_call.1} parent=1 // pred_check_branch
      %77 = sbr.rel (0) target = $region41
    $region40: #{tpu_custom_call.1} parent=1 // pred_region
      %78 = dma.done [#allocation9], 4096
    $region41: #{tpu_custom_call.1} parent=1 // pred_fallthru
      _
    %v79 = vld [vmem:[#allocation2] sm:$0xff]
    %v80 = vld [vmem:[#allocation2 + $0x8] sm:$0xff]
    %v81 = vld [vmem:[#allocation2 + $0x10] sm:$0xff]
    %v82 = vld [vmem:[#allocation2 + $0x18] sm:$0xff]
    %v83 = vld [vmem:[#allocation2 + $0x20] sm:$0xff]
    %v84 = vld [vmem:[#allocation2 + $0x28] sm:$0xff]
    %v85 = vld [vmem:[#allocation2 + $0x30] sm:$0xff]
    %v86 = vld [vmem:[#allocation2 + $0x38] sm:$0xff]
    %v87 = vld [vmem:[#allocation7] sm:$0xff]
    %v88 = vld [vmem:[#allocation7 + $0x8] sm:$0xff]
    %v89 = vld [vmem:[#allocation7 + $0x10] sm:$0xff]
    %v90 = vld [vmem:[#allocation7 + $0x18] sm:$0xff]
    %v91 = vld [vmem:[#allocation7 + $0x20] sm:$0xff]
    %v92 = vld [vmem:[#allocation7 + $0x28] sm:$0xff]
    %v93 = vld [vmem:[#allocation7 + $0x30] sm:$0xff]
    %v94 = vld [vmem:[#allocation7 + $0x38] sm:$0xff]
    %v95 = vld [vmem:[#allocation5] sm:$0xff]
    %v96 = vld [vmem:[#allocation5 + $0x8] sm:$0xff]
    %v97 = vld [vmem:[#allocation5 + $0x10] sm:$0xff]
    %v98 = vld [vmem:[#allocation5 + $0x18] sm:$0xff]
    %v99 = vld [vmem:[#allocation5 + $0x20] sm:$0xff]
    %v100 = vld [vmem:[#allocation5 + $0x28] sm:$0xff]
    %v101 = vld [vmem:[#allocation5 + $0x30] sm:$0xff]
    %v102 = vld [vmem:[#allocation5 + $0x38] sm:$0xff]
    %v103 = vld [vmem:[#allocation5 + $0x40] sm:$0xff]
    %v104 = vld [vmem:[#allocation5 + $0x48] sm:$0xff]
    %v105 = vld [vmem:[#allocation5 + $0x50] sm:$0xff]
    %v106 = vld [vmem:[#allocation5 + $0x58] sm:$0xff]
    %v107 = vld [vmem:[#allocation5 + $0x60] sm:$0xff]
    %v108 = vld [vmem:[#allocation5 + $0x68] sm:$0xff]
    %v109 = vld [vmem:[#allocation5 + $0x70] sm:$0xff]
    %v110 = vld [vmem:[#allocation5 + $0x78] sm:$0xff]
    %v111 = vld [vmem:[#allocation8] sm:$0xff]
    %v112 = vld [vmem:[#allocation8 + $0x8] sm:$0xff]
    %v113 = vld [vmem:[#allocation8 + $0x10] sm:$0xff]
    %v114 = vld [vmem:[#allocation8 + $0x18] sm:$0xff]
    %v115 = vld [vmem:[#allocation8 + $0x20] sm:$0xff]
    %v116 = vld [vmem:[#allocation8 + $0x28] sm:$0xff]
    %v117 = vld [vmem:[#allocation8 + $0x30] sm:$0xff]
    %v118 = vld [vmem:[#allocation8 + $0x38] sm:$0xff]
    %v119 = vld [vmem:[#allocation8 + $0x40] sm:$0xff]
    %v120 = vld [vmem:[#allocation8 + $0x48] sm:$0xff]
    %v121 = vld [vmem:[#allocation8 + $0x50] sm:$0xff]
    %v122 = vld [vmem:[#allocation8 + $0x58] sm:$0xff]
    %v123 = vld [vmem:[#allocation8 + $0x60] sm:$0xff]
    %v124 = vld [vmem:[#allocation8 + $0x68] sm:$0xff]
    %v125 = vld [vmem:[#allocation8 + $0x70] sm:$0xff]
    %v126 = vld [vmem:[#allocation8 + $0x78] sm:$0xff]
    %v127 = vld [vmem:[#allocation8 + $0x80] sm:$0xff]
    %v128 = vld [vmem:[#allocation8 + $0x88] sm:$0xff]
    %v129 = vld [vmem:[#allocation8 + $0x90] sm:$0xff]
    %v130 = vld [vmem:[#allocation8 + $0x98] sm:$0xff]
    %v131 = vld [vmem:[#allocation8 + $0xa0] sm:$0xff]
    %v132 = vld [vmem:[#allocation8 + $0xa8] sm:$0xff]
    %v133 = vld [vmem:[#allocation8 + $0xb0] sm:$0xff]
    %v134 = vld [vmem:[#allocation8 + $0xb8] sm:$0xff]
    %v135 = vld [vmem:[#allocation8 + $0xc0] sm:$0xff]
    %v136 = vld [vmem:[#allocation8 + $0xc8] sm:$0xff]
    %v137 = vld [vmem:[#allocation8 + $0xd0] sm:$0xff]
    %v138 = vld [vmem:[#allocation8 + $0xd8] sm:$0xff]
    %v139 = vld [vmem:[#allocation8 + $0xe0] sm:$0xff]
    %v140 = vld [vmem:[#allocation8 + $0xe8] sm:$0xff]
    %v141 = vld [vmem:[#allocation8 + $0xf0] sm:$0xff]
    %v142 = vld [vmem:[#allocation8 + $0xf8] sm:$0xff]
    %143 = vmatprep.subr.mxu0 0.0
    %144 = vmatpush1.msra.mxu0 %v111
    %145 = vmatprep.subr.mxu0 0.0
    %146 = vmatpush1.msra.mxu0 %v112
    %147 = vmatprep.subr.mxu0 0.0
    %148 = vmatpush1.msra.mxu0 %v113
    %149 = vmatprep.subr.mxu0 0.0
    %150 = vmatpush1.msra.mxu0 %v114
    %151 = vmatprep.subr.mxu0 0.0
    %152 = vmatpush1.msra.mxu0 %v115
    %153 = vmatprep.subr.mxu0 0.0
    %154 = vmatpush1.msra.mxu0 %v116
    %155 = vmatprep.subr.mxu0 0.0
    %156 = vmatpush1.msra.mxu0 %v117
    %157 = vmatprep.subr.mxu0 0.0
    %158 = vmatpush1.msra.mxu0 %v118
    %159 = vmatprep.subr.mxu0 0.0
    %160 = vmatpush1.msra.mxu0 %v119
    %161 = vmatprep.subr.mxu0 0.0
    %162 = vmatpush1.msra.mxu0 %v120
    %163 = vmatprep.subr.mxu0 0.0
    %164 = vmatpush1.msra.mxu0 %v121
    %165 = vmatprep.subr.mxu0 0.0
    %166 = vmatpush1.msra.mxu0 %v122
    %167 = vmatprep.subr.mxu0 0.0
    %168 = vmatpush1.msra.mxu0 %v123
    %169 = vmatprep.subr.mxu0 0.0
    %170 = vmatpush1.msra.mxu0 %v124
    %171 = vmatprep.subr.mxu0 0.0
    %172 = vmatpush1.msra.mxu0 %v125
    %173 = vmatprep.subr.mxu0 0.0
    %174 = vmatpush1.msra.mxu0 %v126
    %175 = vmatprep.subr.mxu0 0.0
    %176 = vmatpush1.msra.mxu0 %v127
    %177 = vmatprep.subr.mxu0 0.0
    %178 = vmatpush1.msra.mxu0 %v128
    %179 = vmatprep.subr.mxu0 0.0
    %180 = vmatpush1.msra.mxu0 %v129
    %181 = vmatprep.subr.mxu0 0.0
    %182 = vmatpush1.msra.mxu0 %v130
    %183 = vmatprep.subr.mxu0 0.0
    %184 = vmatpush1.msra.mxu0 %v131
    %185 = vmatprep.subr.mxu0 0.0
    %186 = vmatpush1.msra.mxu0 %v132
    %187 = vmatprep.subr.mxu0 0.0
    %188 = vmatpush1.msra.mxu0 %v133
    %189 = vmatprep.subr.mxu0 0.0
    %190 = vmatpush1.msra.mxu0 %v134
    %191 = vmatprep.subr.mxu0 0.0
    %192 = vmatpush1.msra.mxu0 %v135
    %193 = vmatprep.subr.mxu0 0.0
    %194 = vmatpush1.msra.mxu0 %v136
    %195 = vmatprep.subr.mxu0 0.0
    %196 = vmatpush1.msra.mxu0 %v137
    %197 = vmatprep.subr.mxu0 0.0
    %198 = vmatpush1.msra.mxu0 %v138
    %199 = vmatprep.subr.mxu0 0.0
    %200 = vmatpush1.msra.mxu0 %v139
    %201 = vmatprep.subr.mxu0 0.0
    %202 = vmatpush1.msra.mxu0 %v140
    %203 = vmatprep.subr.mxu0 0.0
    %204 = vmatpush1.msra.mxu0 %v141
    %205 = vmatprep.subr.mxu0 0.0
    %206 = vmatpush1.msra.mxu0 %v142
    %207 = vmatprep.mubr.f32.mxu0 %v96
    %208 = vmatmul.mubr.f32.gmra.mrb[0].mxu0 %v95
    %v209 = vpop.f32.mrb[0].mxu0
    %v210 = vadd.f32 0.0, %v209
    %v211 = vpop.f32.mrb[0].mxu0
    %212 = vmatprep.mubr.f32.mxu0 %v98
    %213 = vmatmul.mubr.f32.gmra.mrb[0].mxu0 %v97
    %v214 = vpop.f32.mrb[0].mxu0
    %v215 = vadd.f32 0.0, %v214
    %v216 = vpop.f32.mrb[0].mxu0
    %217 = vmatprep.mubr.f32.mxu0 %v100
    %218 = vmatmul.mubr.f32.gmra.mrb[0].mxu0 %v99
    %v219 = vpop.f32.mrb[0].mxu0
    %v220 = vadd.f32 0.0, %v219
    %v221 = vpop.f32.mrb[0].mxu0
    %222 = vmatprep.mubr.f32.mxu0 %v102
    %223 = vmatmul.mubr.f32.gmra.mrb[0].mxu0 %v101
    %v224 = vpop.f32.mrb[0].mxu0
    %v225 = vadd.f32 0.0, %v224
    %v226 = vpop.f32.mrb[0].mxu0
    %227 = vmatprep.mubr.f32.mxu0 %v104
    %228 = vmatmul.mubr.f32.gmra.mrb[0].mxu0 %v103
    %v229 = vpop.f32.mrb[0].mxu0
    %v230 = vadd.f32 0.0, %v229
    %v231 = vpop.f32.mrb[0].mxu0
    %232 = vmatprep.mubr.f32.mxu0 %v106
    %233 = vmatmul.mubr.f32.gmra.mrb[0].mxu0 %v105
    %v234 = vpop.f32.mrb[0].mxu0
    %v235 = vadd.f32 0.0, %v234
    %v236 = vpop.f32.mrb[0].mxu0
    %237 = vmatprep.mubr.f32.mxu0 %v108
    %238 = vmatmul.mubr.f32.gmra.mrb[0].mxu0 %v107
    %v239 = vpop.f32.mrb[0].mxu0
    %v240 = vadd.f32 0.0, %v239
    %v241 = vpop.f32.mrb[0].mxu0
    %242 = vmatprep.mubr.f32.mxu0 %v110
    %243 = vmatmul.mubr.f32.gmra.mrb[0].mxu0 %v109
    %v244 = vpop.f32.mrb[0].mxu0
    %v245 = vadd.f32 0.0, %v244
    %v246 = vpop.f32.mrb[0].mxu0
    %247 = vdwg.mxu0
    %vm248 = vcmask 523264
    %v250 = vsel %vm248, %v79, 0
    %v253 = vsel %vm248, %v80, 0
    %v256 = vsel %vm248, %v81, 0
    %v259 = vsel %vm248, %v82, 0
    %v262 = vsel %vm248, %v83, 0
    %v265 = vsel %vm248, %v84, 0
    %v268 = vsel %vm248, %v85, 0
    %v271 = vsel %vm248, %v86, 0
    %273 = vmatprep.subr.mxu0 0.0
    %274 = vmatpush1.msra.mxu0 %v87
    %275 = vmatprep.subr.mxu0 0.0
    %276 = vmatpush1.msra.mxu0 %v88
    %277 = vmatprep.subr.mxu0 0.0
    %278 = vmatpush1.msra.mxu0 %v89
    %279 = vmatprep.subr.mxu0 0.0
    %280 = vmatpush1.msra.mxu0 %v90
    %281 = vmatprep.subr.mxu0 0.0
    %282 = vmatpush1.msra.mxu0 %v91
    %283 = vmatprep.subr.mxu0 0.0
    %284 = vmatpush1.msra.mxu0 %v92
    %285 = vmatprep.subr.mxu0 0.0
    %286 = vmatpush1.msra.mxu0 %v93
    %287 = vmatprep.subr.mxu0 0.0
    %288 = vmatpush1.msra.mxu0 %v94
    %289 = vmatprep.subr.mxu0 0.0
    %290 = vmatpush1.msra.mxu0 0.0
    %291 = vmatprep.subr.mxu0 0.0
    %292 = vmatpush1.msra.mxu0 0.0
    %293 = vmatprep.subr.mxu0 0.0
    %294 = vmatpush1.msra.mxu0 0.0
    %295 = vmatprep.subr.mxu0 0.0
    %296 = vmatpush1.msra.mxu0 0.0
    %297 = vmatprep.subr.mxu0 0.0
    %298 = vmatpush1.msra.mxu0 0.0
    %299 = vmatprep.subr.mxu0 0.0
    %300 = vmatpush1.msra.mxu0 0.0
    %301 = vmatprep.subr.mxu0 0.0
    %302 = vmatpush1.msra.mxu0 0.0
    %303 = vmatprep.subr.mxu0 0.0
    %304 = vmatpush1.msra.mxu0 0.0
    %305 = vmatprep.subr.mxu0 0.0
    %306 = vmatpush1.msra.mxu0 0.0
    %307 = vmatprep.subr.mxu0 0.0
    %308 = vmatpush1.msra.mxu0 0.0
    %309 = vmatprep.subr.mxu0 0.0
    %310 = vmatpush1.msra.mxu0 0.0
    %311 = vmatprep.subr.mxu0 0.0
    %312 = vmatpush1.msra.mxu0 0.0
    %313 = vmatprep.subr.mxu0 0.0
    %314 = vmatpush1.msra.mxu0 0.0
    %315 = vmatprep.subr.mxu0 0.0
    %316 = vmatpush1.msra.mxu0 0.0
    %317 = vmatprep.subr.mxu0 0.0
    %318 = vmatpush1.msra.mxu0 0.0
    %319 = vmatprep.subr.mxu0 0.0
    %320 = vmatpush1.msra.mxu0 0.0
    %321 = vmatprep.subr.mxu0 0.0
    %322 = vmatpush1.msra.mxu0 0.0
    %323 = vmatprep.subr.mxu0 0.0
    %324 = vmatpush1.msra.mxu0 0.0
    %325 = vmatprep.subr.mxu0 0.0
    %326 = vmatpush1.msra.mxu0 0.0
    %327 = vmatprep.subr.mxu0 0.0
    %328 = vmatpush1.msra.mxu0 0.0
    %329 = vmatprep.subr.mxu0 0.0
    %330 = vmatpush1.msra.mxu0 0.0
    %331 = vmatprep.subr.mxu0 0.0
    %332 = vmatpush1.msra.mxu0 0.0
    %333 = vmatprep.subr.mxu0 0.0
    %334 = vmatpush1.msra.mxu0 0.0
    %335 = vmatprep.subr.mxu0 0.0
    %336 = vmatpush1.msra.mxu0 0.0
    %337 = vmatprep.mubr.f32.mxu0 0.0
    %338 = vmatmul.mubr.f32.gmra.mrb[0].mxu0 %v250
    %v339 = vpop.f32.mrb[0].mxu0
    %v340 = vadd.f32 %v210, %v339
    %v341 = vpop.f32.mrb[0].mxu0
    %342 = vmatprep.mubr.f32.mxu0 0.0
    %343 = vmatmul.mubr.f32.gmra.mrb[0].mxu0 %v253
    %v344 = vpop.f32.mrb[0].mxu0
    %v345 = vadd.f32 %v215, %v344
    %v346 = vpop.f32.mrb[0].mxu0
    %347 = vmatprep.mubr.f32.mxu0 0.0
    %348 = vmatmul.mubr.f32.gmra.mrb[0].mxu0 %v256
    %v349 = vpop.f32.mrb[0].mxu0
    %v350 = vadd.f32 %v220, %v349
    %v351 = vpop.f32.mrb[0].mxu0
    %352 = vmatprep.mubr.f32.mxu0 0.0
    %353 = vmatmul.mubr.f32.gmra.mrb[0].mxu0 %v259
    %v354 = vpop.f32.mrb[0].mxu0
    %v355 = vadd.f32 %v225, %v354
    %v356 = vpop.f32.mrb[0].mxu0
    %357 = vmatprep.mubr.f32.mxu0 0.0
    %358 = vmatmul.mubr.f32.gmra.mrb[0].mxu0 %v262
    %v359 = vpop.f32.mrb[0].mxu0
    %v360 = vadd.f32 %v230, %v359
    %v361 = vpop.f32.mrb[0].mxu0
    %362 = vmatprep.mubr.f32.mxu0 0.0
    %363 = vmatmul.mubr.f32.gmra.mrb[0].mxu0 %v265
    %v364 = vpop.f32.mrb[0].mxu0
    %v365 = vadd.f32 %v235, %v364
    %v366 = vpop.f32.mrb[0].mxu0
    %367 = vmatprep.mubr.f32.mxu0 0.0
    %368 = vmatmul.mubr.f32.gmra.mrb[0].mxu0 %v268
    %v369 = vpop.f32.mrb[0].mxu0
    %v370 = vadd.f32 %v240, %v369
    %v371 = vpop.f32.mrb[0].mxu0
    %372 = vmatprep.mubr.f32.mxu0 0.0
    %373 = vmatmul.mubr.f32.gmra.mrb[0].mxu0 %v271
    %v374 = vpop.f32.mrb[0].mxu0
    %v375 = vadd.f32 %v245, %v374
    %v376 = vpop.f32.mrb[0].mxu0
    %377 = vdwg.mxu0
    %v378 = vld [vmem:[%s5] sm:$0x1]
    %v380 = vlaneseq
    %v381 = vshrl.u32 %v380, 7
    %v382 = vsub.s32 0, %v381
    %v383 = vrot.slane %v378, %v382
    %v385 = vadd.f32 %v340, %v383
    %v386 = vadd.f32 %v345, %v383
    %v387 = vadd.f32 %v350, %v383
    %v388 = vadd.f32 %v355, %v383
    %v389 = vadd.f32 %v360, %v383
    %v390 = vadd.f32 %v365, %v383
    %v391 = vadd.f32 %v370, %v383
    %v392 = vadd.f32 %v375, %v383
    %v393 = vtanh.pop %v385
    %v394 = vtanh.pop %v386
    %v395 = vtanh.pop %v387
    %v396 = vtanh.pop %v388
    %v397 = vtanh.pop %v389
    %v398 = vtanh.pop %v390
    %v399 = vtanh.pop %v391
    %v400 = vtanh.pop %v392
    %v401 = vld [vmem:[%s2] sm:$0xff]
    %v402 = vlaneseq
    %v403 = vshrl.u32 %v402, 7
    %v404 = vsub.s32 0, %v403
    %v405 = vrot.slane %v401, %v404
    %407 = vbcast.lane.b32.xlu0 %v405, 256
    %v408 = vpop.permute.xlu0 %407
    %v409 = vlaneseq
    %v410 = vshrl.u32 %v409, 7
    %v411 = vsub.s32 1, %v410
    %v412 = vrot.slane %v401, %v411
    %414 = vbcast.lane.b32.xlu0 %v412, 256
    %v415 = vpop.permute.xlu0 %414
    %v416 = vlaneseq
    %v417 = vshrl.u32 %v416, 7
    %v418 = vsub.s32 2, %v417
    %v419 = vrot.slane %v401, %v418
    %421 = vbcast.lane.b32.xlu0 %v419, 256
    %v422 = vpop.permute.xlu0 %421
    %v423 = vlaneseq
    %v424 = vshrl.u32 %v423, 7
    %v425 = vsub.s32 3, %v424
    %v426 = vrot.slane %v401, %v425
    %428 = vbcast.lane.b32.xlu0 %v426, 256
    %v429 = vpop.permute.xlu0 %428
    %v430 = vlaneseq
    %v431 = vshrl.u32 %v430, 7
    %v432 = vsub.s32 4, %v431
    %v433 = vrot.slane %v401, %v432
    %435 = vbcast.lane.b32.xlu0 %v433, 256
    %v436 = vpop.permute.xlu0 %435
    %v437 = vlaneseq
    %v438 = vshrl.u32 %v437, 7
    %v439 = vsub.s32 5, %v438
    %v440 = vrot.slane %v401, %v439
    %442 = vbcast.lane.b32.xlu0 %v440, 256
    %v443 = vpop.permute.xlu0 %442
    %v444 = vlaneseq
    %v445 = vshrl.u32 %v444, 7
    %v446 = vsub.s32 6, %v445
    %v447 = vrot.slane %v401, %v446
    %449 = vbcast.lane.b32.xlu0 %v447, 256
    %v450 = vpop.permute.xlu0 %449
    %v451 = vlaneseq
    %v452 = vshrl.u32 %v451, 7
    %v453 = vsub.s32 7, %v452
    %v454 = vrot.slane %v401, %v453
    %456 = vbcast.lane.b32.xlu0 %v454, 256
    %v457 = vpop.permute.xlu0 %456
    %v458 = vmul.f32 %v393, %v408
    %v459 = vmul.f32 %v394, %v415
    %v460 = vmul.f32 %v395, %v422
    %v461 = vmul.f32 %v396, %v429
    %v462 = vmul.f32 %v397, %v436
    %v463 = vmul.f32 %v398, %v443
    %v464 = vmul.f32 %v399, %v450
    %v465 = vmul.f32 %v400, %v457
    %v466 = vrot.slane %v458, 4
    %v467 = vadd.f32 %v458, %v466
    %v468 = vrot.slane %v467, 2
    %v469 = vadd.f32 %v467, %v468
    %v470 = vrot.slane %v469, 1
    %v471 = vadd.f32 %v469, %v470
    %v472 = vrot.slane %v459, 4
    %v473 = vadd.f32 %v459, %v472
    %v474 = vrot.slane %v473, 2
    %v475 = vadd.f32 %v473, %v474
    %v476 = vrot.slane %v475, 1
    %v477 = vadd.f32 %v475, %v476
    %v478 = vrot.slane %v460, 4
    %v479 = vadd.f32 %v460, %v478
    %v480 = vrot.slane %v479, 2
    %v481 = vadd.f32 %v479, %v480
    %v482 = vrot.slane %v481, 1
    %v483 = vadd.f32 %v481, %v482
    %v484 = vrot.slane %v461, 4
    %v485 = vadd.f32 %v461, %v484
    %v486 = vrot.slane %v485, 2
    %v487 = vadd.f32 %v485, %v486
    %v488 = vrot.slane %v487, 1
    %v489 = vadd.f32 %v487, %v488
    %v490 = vrot.slane %v462, 4
    %v491 = vadd.f32 %v462, %v490
    %v492 = vrot.slane %v491, 2
    %v493 = vadd.f32 %v491, %v492
    %v494 = vrot.slane %v493, 1
    %v495 = vadd.f32 %v493, %v494
    %v496 = vrot.slane %v463, 4
    %v497 = vadd.f32 %v463, %v496
    %v498 = vrot.slane %v497, 2
    %v499 = vadd.f32 %v497, %v498
    %v500 = vrot.slane %v499, 1
    %v501 = vadd.f32 %v499, %v500
    %v502 = vrot.slane %v464, 4
    %v503 = vadd.f32 %v464, %v502
    %v504 = vrot.slane %v503, 2
    %v505 = vadd.f32 %v503, %v504
    %v506 = vrot.slane %v505, 1
    %v507 = vadd.f32 %v505, %v506
    %v508 = vrot.slane %v465, 4
    %v509 = vadd.f32 %v465, %v508
    %v510 = vrot.slane %v509, 2
    %v511 = vadd.f32 %v509, %v510
    %v512 = vrot.slane %v511, 1
    %v513 = vadd.f32 %v511, %v512
    %vm522 = vcmask 1041409
    %v523 = vsel %vm522, %v477, %v471
    %vm524 = vcmask 1042434
    %v525 = vsel %vm524, %v483, %v523
    %vm526 = vcmask 1043459
    %v527 = vsel %vm526, %v489, %v525
    %vm528 = vcmask 1044484
    %v529 = vsel %vm528, %v495, %v527
    %vm530 = vcmask 1045509
    %v531 = vsel %vm530, %v501, %v529
    %vm532 = vcmask 1046534
    %v533 = vsel %vm532, %v507, %v531
    %vm534 = vcmask 1047559
    %v535 = vsel %vm534, %v513, %v533
    %537 = vst [vmem:[#allocation10] sm:$0xff] %v535
    // Predicated region
    $region42: #{tpu_custom_call.1} parent=1 // pred_check
      _
    $region43: #{tpu_custom_call.1} parent=1 // pred_check_branch
      %539 = sbr.rel (0) target = $region45
    $region44: #{tpu_custom_call.1} parent=1 // pred_region
      %s541 = ssub.s32 128, 64
      %542 = vsyncadd [#allocation4], %s541
      %s543 = sshll.u32 [#allocation10], 4
      %s544 = int_to_ptr.vmem [resolvable:$true] %s543
      %549 = dma.vmem_to_hbm [thread:$0]  %s544, 64, %s6, [#allocation4], 64, 64, 4
    $region45: #{tpu_custom_call.1} parent=1 // pred_fallthru
      _
    // Predicated region
    $region46: #{tpu_custom_call.1} parent=1 // pred_check
      _
    $region47: #{tpu_custom_call.1} parent=1 // pred_check_branch
      %551 = sbr.rel (0) target = $region49
    $region48: #{tpu_custom_call.1} parent=1 // pred_region
      %552 = dma.done [#allocation4], 128
    $region49: #{tpu_custom_call.1} parent=1 // pred_fallthru
      _
    %553 = vsyncpa [#allocation3], 1
    %554 = vsyncpa [#allocation6], 1
    %555 = vsyncpa [#allocation9], 1
    %556 = vsyncpa [#allocation4], 1

</llo_original>
